<compile_context>
chip_gen: v7x
topology: tpu7x:2x2x1
jax: 0.10.0
libtpu: 0.0.40
codegen_flags: <defaults>
</compile_context>

<pallas_src>
import functools

import jax
import jax.numpy as jnp
from jax.experimental import pallas as pl
from jax.experimental.pallas import tpu as pltpu


# -----------------------------------------------------------------------------
# One grid step == one affine-coupling flow applied in place to the
# VMEM-resident y block.  For flow index i:
#   even i: x1 = y[:, :half] (identity),  x2 = y[:, half:] (transformed)
#   odd  i: x1 = y[:, half:] (identity),  x2 = y[:, :half] (transformed)
#   h  = relu(x1 @ W1 + b1)
#   st = h @ W_st + b_st ;  s = tanh(st[:, :half]) ; t = st[:, half:]
#   x2 <- x2 * exp(s) + t ;  logdet += sum(s, axis=-1)
# -----------------------------------------------------------------------------
def _flow_kernel(half, x_ref, w1_ref, b1_ref, wst_ref, bst_ref, y_ref, ld_ref):
    i = pl.program_id(0)

    @pl.when(i == 0)
    def _init():
        # Seed the VMEM-resident state from the input once; zero the logdet.
        y_ref[...] = x_ref[...]
        ld_ref[...] = jnp.zeros_like(ld_ref)

    def _step(x1_start, x2_start):
        # Static slices (x1_start/x2_start are Python ints) -> no dynamic math.
        x1 = y_ref[:, x1_start:x1_start + half]          # [B, half] identity
        x2 = y_ref[:, x2_start:x2_start + half]          # [B, half] transformed

        h = jnp.maximum(
            jnp.dot(x1, w1_ref[...], preferred_element_type=jnp.float32)
            + b1_ref[...],
            0.0)                                         # relu       [B, H]

        # Fused s|t head: one MXU push instead of two narrow ones.
        st = jnp.dot(h, wst_ref[...],
                     preferred_element_type=jnp.float32) + bst_ref[...]
        s = jnp.tanh(st[:, :half])                       # EUP
        t = st[:, half:]

        # XLU reduce issued before the EUP exp so the scheduler can co-issue.
        ld_ref[...] += jnp.sum(s, axis=1, keepdims=True)
        # Direct slice store: only the transformed half is rewritten.
        y_ref[:, x2_start:x2_start + half] = x2 * jnp.exp(s) + t

    @pl.when(i % 2 == 0)
    def _even():
        _step(0, half)

    @pl.when(i % 2 == 1)
    def _odd():
        _step(half, 0)


def flow_forward(x, stacked_params):
    """Composes all coupling flows in a single pallas_call. x: [B, D] f32."""
    w1, b1, wst, bst = stacked_params
    n_flows = w1.shape[0]
    B, D = x.shape
    half = D // 2
    H = w1.shape[-1]

    grid_spec = pltpu.PrefetchScalarGridSpec(
        num_scalar_prefetch=0,
        grid=(n_flows,),
        in_specs=[
            # x stays on the same block index for every step -> DMA'd once.
            pl.BlockSpec((B, D), lambda i: (0, 0)),
            # Per-flow weights streamed (double-buffered) along the flow axis.
            pl.BlockSpec((None, half, H),     lambda i: (i, 0, 0)),
            pl.BlockSpec((None, 1, H),        lambda i: (i, 0, 0)),
            pl.BlockSpec((None, H, 2 * half), lambda i: (i, 0, 0)),
            pl.BlockSpec((None, 1, 2 * half), lambda i: (i, 0, 0)),
        ],
        out_specs=(
            # Same block every step => VMEM-resident accumulators, one writeback.
            pl.BlockSpec((B, D), lambda i: (0, 0)),
            pl.BlockSpec((B, 1), lambda i: (0, 0)),
        ),
    )

    y, ld = pl.pallas_call(
        functools.partial(_flow_kernel, half),
        out_shape=(
            jax.ShapeDtypeStruct((B, D), jnp.float32),
            jax.ShapeDtypeStruct((B, 1), jnp.float32),
        ),
        grid_spec=grid_spec,
        compiler_params=pltpu.CompilerParams(
            dimension_semantics=("arbitrary",)),   # flows are sequentially dependent
    )(x, w1, b1, wst, bst)
    return y, ld[:, 0]                              # logdet per sample: [B]


# -----------------------------------------------------------------------------
# Pure-JAX reference (per-flow param list), mirroring Flow.forward exactly.
# -----------------------------------------------------------------------------
def flow_forward_ref(x, flow_params):
    B, D = x.shape
    half = D // 2
    logdet = jnp.zeros((B,), dtype=jnp.float32)
    for i, (w1, b1, ws, bs, wt, bt) in enumerate(flow_params):
        flip = (i % 2) == 1
        if flip:
            x = jnp.concatenate([x[:, half:], x[:, :half]], axis=1)
        x1, x2 = x[:, :half], x[:, half:]
        h = jax.nn.relu(x1 @ w1 + b1)
        s = jnp.tanh(h @ ws + bs)
        t = h @ wt + bt
        y2 = x2 * jnp.exp(s) + t
        x = jnp.concatenate([x1, y2], axis=1)
        if flip:
            x = jnp.concatenate([x[:, half:], x[:, :half]], axis=1)
        logdet = logdet + jnp.sum(s, axis=-1)
    return x, logdet


def init_flow_params(key, n_flows, D, H):
    half = D // 2
    params = []
    for _ in range(n_flows):
        k1, k2, k3, key = jax.random.split(key, 4)
        w1 = jax.random.normal(k1, (half, H), jnp.float32) * 0.1
        b1 = jnp.zeros((1, H), jnp.float32)
        ws = jax.random.normal(k2, (H, half), jnp.float32) * 0.1
        bs = jnp.zeros((1, half), jnp.float32)
        wt = jax.random.normal(k3, (H, half), jnp.float32) * 0.1
        bt = jnp.zeros((1, half), jnp.float32)
        params.append((w1, b1, ws, bs, wt, bt))
    return params


def stack_flow_params(flow_params):
    """Stack per-flow params along a leading flow axis; fuse the s/t heads."""
    w1 = jnp.stack([p[0] for p in flow_params], axis=0)                       # [N, half, H]
    b1 = jnp.stack([p[1] for p in flow_params], axis=0)                       # [N, 1, H]
    wst = jnp.stack([jnp.concatenate([p[2], p[4]], axis=1)                    # [N, H, 2*half]
                     for p in flow_params], axis=0)
    bst = jnp.stack([jnp.concatenate([p[3], p[5]], axis=1)                    # [N, 1, 2*half]
                     for p in flow_params], axis=0)
    return w1, b1, wst, bst


# TODO(synk): Flow.inverse (reversed composition of flow.inverse) is not part of
# the forward spec and is not implemented here.

if __name__ == "__main__":
    B, D, H = 8, 32, 32          # batch, features, conditioner hidden width
    N_FLOWS = 4

    key = jax.random.PRNGKey(0)
    kx, kp = jax.random.split(key)
    x = jax.random.normal(kx, (B, D), jnp.float32)
    flow_params = init_flow_params(kp, N_FLOWS, D, H)
    stacked = stack_flow_params(flow_params)

    y, logdet = jax.jit(flow_forward)(x, stacked)
    y = jax.block_until_ready(y)
    logdet = jax.block_until_ready(logdet)

    y_ref, logdet_ref = flow_forward_ref(x, flow_params)
    assert y.shape == (B, D) and logdet.shape == (B,)
    assert jnp.allclose(y, y_ref, atol=1e-5, rtol=1e-5)
    assert jnp.allclose(logdet, logdet_ref, atol=1e-5, rtol=1e-5)

    print("KERNEL_OK")
</pallas_src>

<mosaic_0001>
module attributes {stable_mosaic.version = 11 : i64} {
  func.func @_flow_kernel(%arg0: i32, %arg1: memref<8x32xf32, #tpu.memory_space<vmem>>, %arg2: memref<1x16x32xf32, #tpu.memory_space<vmem>>, %arg3: memref<1x1x32xf32, #tpu.memory_space<vmem>>, %arg4: memref<1x32x32xf32, #tpu.memory_space<vmem>>, %arg5: memref<1x1x32xf32, #tpu.memory_space<vmem>>, %arg6: memref<8x32xf32, #tpu.memory_space<vmem>>, %arg7: memref<8x1xf32, #tpu.memory_space<vmem>>) attributes {dimension_semantics = [#tpu.dimension_semantics<arbitrary>], iteration_bounds = array<i64: 4>, scalar_prefetch = 0 : i64, scratch_operands = 0 : i64, tpu.core_type = #tpu.core_type<tc>, window_params = [{pipeline_mode = #tpu.pipeline_mode<synchronous>, transform_indices = @transform_0, window_bounds = array<i64: 8, 32>}, {transform_indices = @transform_1, window_bounds = array<i64: 1, 16, 32>}, {transform_indices = @transform_2, window_bounds = array<i64: 1, 1, 32>}, {transform_indices = @transform_3, window_bounds = array<i64: 1, 32, 32>}, {transform_indices = @transform_4, window_bounds = array<i64: 1, 1, 32>}, {pipeline_mode = #tpu.pipeline_mode<synchronous>, transform_indices = @transform_5, window_bounds = array<i64: 8, 32>}, {pipeline_mode = #tpu.pipeline_mode<synchronous>, transform_indices = @transform_6, window_bounds = array<i64: 8, 1>}]} {
    %c0_i32 = arith.constant 0 : i32
    %0 = arith.cmpi eq, %arg0, %c0_i32 : i32
    %1 = arith.extui %0 : i1 to i32
    %c0_i32_0 = arith.constant 0 : i32
    %2 = arith.cmpi ne, %1, %c0_i32_0 : i32
    scf.if %2 {
      %c0 = arith.constant 0 : index
      %c0_15 = arith.constant 0 : index
      %29 = vector.load %arg1[%c0, %c0_15] : memref<8x32xf32, #tpu.memory_space<vmem>>, vector<8x32xf32>
      %c0_16 = arith.constant 0 : index
      %c0_17 = arith.constant 0 : index
      %30 = vector.load %arg6[%c0_16, %c0_17] : memref<8x32xf32, #tpu.memory_space<vmem>>, vector<8x32xf32>
      tpu.vector_store %arg6[%c0_16, %c0_17], %29 {strides = array<i32>} : memref<8x32xf32, #tpu.memory_space<vmem>>, vector<8x32xf32>,
      %cst = arith.constant 0.000000e+00 : f32
      %31 = vector.broadcast %cst : f32 to vector<8x1xf32>
      %c0_18 = arith.constant 0 : index
      %c0_19 = arith.constant 0 : index
      %32 = vector.load %arg7[%c0_18, %c0_19] : memref<8x1xf32, #tpu.memory_space<vmem>>, vector<8x1xf32>
      tpu.vector_store %arg7[%c0_18, %c0_19], %31 {strides = array<i32>} : memref<8x1xf32, #tpu.memory_space<vmem>>, vector<8x1xf32>,
    } else {
    }
    %c2_i32 = arith.constant 2 : i32
    %c0_i32_1 = arith.constant 0 : i32
    %3 = arith.cmpi eq, %c2_i32, %c0_i32_1 : i32
    %c1_i32 = arith.constant 1 : i32
    %4 = arith.select %3, %c1_i32, %c2_i32 : i32
    %5 = arith.remsi %arg0, %4 : i32
    %c0_i32_2 = arith.constant 0 : i32
    %6 = arith.cmpi ne, %5, %c0_i32_2 : i32
    %c0_i32_3 = arith.constant 0 : i32
    %7 = arith.cmpi slt, %5, %c0_i32_3 : i32
    %c0_i32_4 = arith.constant 0 : i32
    %8 = arith.cmpi slt, %4, %c0_i32_4 : i32
    %9 = arith.xori %7, %8 : i1
    %10 = arith.andi %9, %6 : i1
    %11 = arith.addi %5, %4 : i32
    %12 = arith.select %10, %11, %5 : i32
    %c0_i32_5 = arith.constant 0 : i32
    %13 = arith.cmpi eq, %12, %c0_i32_5 : i32
    %14 = arith.extui %13 : i1 to i32
    %c0_i32_6 = arith.constant 0 : i32
    %15 = arith.cmpi ne, %14, %c0_i32_6 : i32
    scf.if %15 {
      %c0 = arith.constant 0 : index
      %c0_15 = arith.constant 0 : index
      %29 = vector.load %arg6[%c0, %c0_15] : memref<8x32xf32, #tpu.memory_space<vmem>>, vector<8x16xf32>
      %c0_16 = arith.constant 0 : index
      %c16 = arith.constant 16 : index
      %30 = vector.load %arg6[%c0_16, %c16] : memref<8x32xf32, #tpu.memory_space<vmem>>, vector<8x16xf32>
      %c0_17 = arith.constant 0 : index
      %c0_18 = arith.constant 0 : index
      %c0_19 = arith.constant 0 : index
      %31 = vector.load %arg2[%c0_17, %c0_18, %c0_19] : memref<1x16x32xf32, #tpu.memory_space<vmem>>, vector<1x16x32xf32>
      %32 = vector.shape_cast %31 : vector<1x16x32xf32> to vector<16x32xf32>
      %cst = arith.constant dense<0.000000e+00> : vector<8x32xf32>
      %33 = tpu.matmul %29, %32, %cst {dimension_numbers = #tpu.dot_dimension_numbers<[1], [0], [0], [1], [0, 0, 1, 1], [], []>} : vector<8x16xf32>, vector<16x32xf32>, vector<8x32xf32> -> vector<8x32xf32>
      %c0_20 = arith.constant 0 : index
      %c0_21 = arith.constant 0 : index
      %c0_22 = arith.constant 0 : index
      %34 = vector.load %arg3[%c0_20, %c0_21, %c0_22] : memref<1x1x32xf32, #tpu.memory_space<vmem>>, vector<1x1x32xf32>
      %35 = vector.shape_cast %34 : vector<1x1x32xf32> to vector<1x32xf32>
      %36 = vector.broadcast %35 : vector<1x32xf32> to vector<8x32xf32>
      %37 = arith.addf %33, %36 : vector<8x32xf32>
      %cst_23 = arith.constant 0.000000e+00 : f32
      %38 = vector.broadcast %cst_23 : f32 to vector<8x32xf32>
      %39 = arith.maximumf %37, %38 : vector<8x32xf32>
      %c0_24 = arith.constant 0 : index
      %c0_25 = arith.constant 0 : index
      %c0_26 = arith.constant 0 : index
      %40 = vector.load %arg4[%c0_24, %c0_25, %c0_26] : memref<1x32x32xf32, #tpu.memory_space<vmem>>, vector<1x32x32xf32>
      %41 = vector.shape_cast %40 : vector<1x32x32xf32> to vector<32x32xf32>
      %cst_27 = arith.constant dense<0.000000e+00> : vector<8x32xf32>
      %42 = tpu.matmul %39, %41, %cst_27 {dimension_numbers = #tpu.dot_dimension_numbers<[1], [0], [0], [1], [0, 0, 1, 1], [], []>} : vector<8x32xf32>, vector<32x32xf32>, vector<8x32xf32> -> vector<8x32xf32>
      %c0_28 = arith.constant 0 : index
      %c0_29 = arith.constant 0 : index
      %c0_30 = arith.constant 0 : index
      %43 = vector.load %arg5[%c0_28, %c0_29, %c0_30] : memref<1x1x32xf32, #tpu.memory_space<vmem>>, vector<1x1x32xf32>
      %44 = vector.shape_cast %43 : vector<1x1x32xf32> to vector<1x32xf32>
      %45 = vector.broadcast %44 : vector<1x32xf32> to vector<8x32xf32>
      %46 = arith.addf %42, %45 : vector<8x32xf32>
      %47 = vector.extract_strided_slice %46 {offsets = [0, 0], sizes = [8, 16], strides = [1, 1]} : vector<8x32xf32> to vector<8x16xf32>
      %48 = math.tanh %47 : vector<8x16xf32>
      %49 = vector.extract_strided_slice %46 {offsets = [0, 16], sizes = [8, 16], strides = [1, 1]} : vector<8x32xf32> to vector<8x16xf32>
      %c0_31 = arith.constant 0 : index
      %c0_32 = arith.constant 0 : index
      %50 = vector.load %arg7[%c0_31, %c0_32] : memref<8x1xf32, #tpu.memory_space<vmem>>, vector<8x1xf32>
      %cst_33 = arith.constant dense<0.000000e+00> : vector<8xf32>
      %51 = vector.multi_reduction <add>, %48, %cst_33 [1] : vector<8x16xf32> to vector<8xf32>
      %52 = vector.shape_cast %51 : vector<8xf32> to vector<8x1xf32>
      %53 = arith.addf %50, %52 : vector<8x1xf32>
      %c0_34 = arith.constant 0 : index
      %c0_35 = arith.constant 0 : index
      %54 = vector.load %arg7[%c0_34, %c0_35] : memref<8x1xf32, #tpu.memory_space<vmem>>, vector<8x1xf32>
      tpu.vector_store %arg7[%c0_34, %c0_35], %53 {strides = array<i32>} : memref<8x1xf32, #tpu.memory_space<vmem>>, vector<8x1xf32>,
      %55 = math.exp %48 : vector<8x16xf32>
      %56 = arith.mulf %30, %55 : vector<8x16xf32>
      %57 = arith.addf %56, %49 : vector<8x16xf32>
      %c0_36 = arith.constant 0 : index
      %c16_37 = arith.constant 16 : index
      %58 = vector.load %arg6[%c0_36, %c16_37] : memref<8x32xf32, #tpu.memory_space<vmem>>, vector<8x16xf32>
      tpu.vector_store %arg6[%c0_36, %c16_37], %57 {strides = array<i32>} : memref<8x32xf32, #tpu.memory_space<vmem>>, vector<8x16xf32>,
    } else {
    }
    %c2_i32_7 = arith.constant 2 : i32
    %c0_i32_8 = arith.constant 0 : i32
    %16 = arith.cmpi eq, %c2_i32_7, %c0_i32_8 : i32
    %c1_i32_9 = arith.constant 1 : i32
    %17 = arith.select %16, %c1_i32_9, %c2_i32_7 : i32
    %18 = arith.remsi %arg0, %17 : i32
    %c0_i32_10 = arith.constant 0 : i32
    %19 = arith.cmpi ne, %18, %c0_i32_10 : i32
    %c0_i32_11 = arith.constant 0 : i32
    %20 = arith.cmpi slt, %18, %c0_i32_11 : i32
    %c0_i32_12 = arith.constant 0 : i32
    %21 = arith.cmpi slt, %17, %c0_i32_12 : i32
    %22 = arith.xori %20, %21 : i1
    %23 = arith.andi %22, %19 : i1
    %24 = arith.addi %18, %17 : i32
    %25 = arith.select %23, %24, %18 : i32
    %c1_i32_13 = arith.constant 1 : i32
    %26 = arith.cmpi eq, %25, %c1_i32_13 : i32
    %27 = arith.extui %26 : i1 to i32
    %c0_i32_14 = arith.constant 0 : i32
    %28 = arith.cmpi ne, %27, %c0_i32_14 : i32
    scf.if %28 {
      %c0 = arith.constant 0 : index
      %c16 = arith.constant 16 : index
      %29 = vector.load %arg6[%c0, %c16] : memref<8x32xf32, #tpu.memory_space<vmem>>, vector<8x16xf32>
      %c0_15 = arith.constant 0 : index
      %c0_16 = arith.constant 0 : index
      %30 = vector.load %arg6[%c0_15, %c0_16] : memref<8x32xf32, #tpu.memory_space<vmem>>, vector<8x16xf32>
      %c0_17 = arith.constant 0 : index
      %c0_18 = arith.constant 0 : index
      %c0_19 = arith.constant 0 : index
      %31 = vector.load %arg2[%c0_17, %c0_18, %c0_19] : memref<1x16x32xf32, #tpu.memory_space<vmem>>, vector<1x16x32xf32>
      %32 = vector.shape_cast %31 : vector<1x16x32xf32> to vector<16x32xf32>
      %cst = arith.constant dense<0.000000e+00> : vector<8x32xf32>
      %33 = tpu.matmul %29, %32, %cst {dimension_numbers = #tpu.dot_dimension_numbers<[1], [0], [0], [1], [0, 0, 1, 1], [], []>} : vector<8x16xf32>, vector<16x32xf32>, vector<8x32xf32> -> vector<8x32xf32>
      %c0_20 = arith.constant 0 : index
      %c0_21 = arith.constant 0 : index
      %c0_22 = arith.constant 0 : index
      %34 = vector.load %arg3[%c0_20, %c0_21, %c0_22] : memref<1x1x32xf32, #tpu.memory_space<vmem>>, vector<1x1x32xf32>
      %35 = vector.shape_cast %34 : vector<1x1x32xf32> to vector<1x32xf32>
      %36 = vector.broadcast %35 : vector<1x32xf32> to vector<8x32xf32>
      %37 = arith.addf %33, %36 : vector<8x32xf32>
      %cst_23 = arith.constant 0.000000e+00 : f32
      %38 = vector.broadcast %cst_23 : f32 to vector<8x32xf32>
      %39 = arith.maximumf %37, %38 : vector<8x32xf32>
      %c0_24 = arith.constant 0 : index
      %c0_25 = arith.constant 0 : index
      %c0_26 = arith.constant 0 : index
      %40 = vector.load %arg4[%c0_24, %c0_25, %c0_26] : memref<1x32x32xf32, #tpu.memory_space<vmem>>, vector<1x32x32xf32>
      %41 = vector.shape_cast %40 : vector<1x32x32xf32> to vector<32x32xf32>
      %cst_27 = arith.constant dense<0.000000e+00> : vector<8x32xf32>
      %42 = tpu.matmul %39, %41, %cst_27 {dimension_numbers = #tpu.dot_dimension_numbers<[1], [0], [0], [1], [0, 0, 1, 1], [], []>} : vector<8x32xf32>, vector<32x32xf32>, vector<8x32xf32> -> vector<8x32xf32>
      %c0_28 = arith.constant 0 : index
      %c0_29 = arith.constant 0 : index
      %c0_30 = arith.constant 0 : index
      %43 = vector.load %arg5[%c0_28, %c0_29, %c0_30] : memref<1x1x32xf32, #tpu.memory_space<vmem>>, vector<1x1x32xf32>
      %44 = vector.shape_cast %43 : vector<1x1x32xf32> to vector<1x32xf32>
      %45 = vector.broadcast %44 : vector<1x32xf32> to vector<8x32xf32>
      %46 = arith.addf %42, %45 : vector<8x32xf32>
      %47 = vector.extract_strided_slice %46 {offsets = [0, 0], sizes = [8, 16], strides = [1, 1]} : vector<8x32xf32> to vector<8x16xf32>
      %48 = math.tanh %47 : vector<8x16xf32>
      %49 = vector.extract_strided_slice %46 {offsets = [0, 16], sizes = [8, 16], strides = [1, 1]} : vector<8x32xf32> to vector<8x16xf32>
      %c0_31 = arith.constant 0 : index
      %c0_32 = arith.constant 0 : index
      %50 = vector.load %arg7[%c0_31, %c0_32] : memref<8x1xf32, #tpu.memory_space<vmem>>, vector<8x1xf32>
      %cst_33 = arith.constant dense<0.000000e+00> : vector<8xf32>
      %51 = vector.multi_reduction <add>, %48, %cst_33 [1] : vector<8x16xf32> to vector<8xf32>
      %52 = vector.shape_cast %51 : vector<8xf32> to vector<8x1xf32>
      %53 = arith.addf %50, %52 : vector<8x1xf32>
      %c0_34 = arith.constant 0 : index
      %c0_35 = arith.constant 0 : index
      %54 = vector.load %arg7[%c0_34, %c0_35] : memref<8x1xf32, #tpu.memory_space<vmem>>, vector<8x1xf32>
      tpu.vector_store %arg7[%c0_34, %c0_35], %53 {strides = array<i32>} : memref<8x1xf32, #tpu.memory_space<vmem>>, vector<8x1xf32>,
      %55 = math.exp %48 : vector<8x16xf32>
      %56 = arith.mulf %30, %55 : vector<8x16xf32>
      %57 = arith.addf %56, %49 : vector<8x16xf32>
      %c0_36 = arith.constant 0 : index
      %c0_37 = arith.constant 0 : index
      %58 = vector.load %arg6[%c0_36, %c0_37] : memref<8x32xf32, #tpu.memory_space<vmem>>, vector<8x16xf32>
      tpu.vector_store %arg6[%c0_36, %c0_37], %57 {strides = array<i32>} : memref<8x32xf32, #tpu.memory_space<vmem>>, vector<8x16xf32>,
    } else {
    }
    return
  }
  func.func @transform_0(%arg0: i32) -> (i32, i32) {
    %c0_i32 = arith.constant 0 : i32
    %c0_i32_0 = arith.constant 0 : i32
    %c0_i32_1 = arith.constant 0 : i32
    return %c0_i32, %c0_i32_0 : i32, i32
  }
  func.func @transform_1(%arg0: i32) -> (i32, i32, i32) {
    %c0_i32 = arith.constant 0 : i32
    %c0_i32_0 = arith.constant 0 : i32
    %c0_i32_1 = arith.constant 0 : i32
    return %arg0, %c0_i32, %c0_i32_0 : i32, i32, i32
  }
  func.func @transform_2(%arg0: i32) -> (i32, i32, i32) {
    %c0_i32 = arith.constant 0 : i32
    %c0_i32_0 = arith.constant 0 : i32
    %c0_i32_1 = arith.constant 0 : i32
    return %arg0, %c0_i32, %c0_i32_0 : i32, i32, i32
  }
  func.func @transform_3(%arg0: i32) -> (i32, i32, i32) {
    %c0_i32 = arith.constant 0 : i32
    %c0_i32_0 = arith.constant 0 : i32
    %c0_i32_1 = arith.constant 0 : i32
    return %arg0, %c0_i32, %c0_i32_0 : i32, i32, i32
  }
  func.func @transform_4(%arg0: i32) -> (i32, i32, i32) {
    %c0_i32 = arith.constant 0 : i32
    %c0_i32_0 = arith.constant 0 : i32
    %c0_i32_1 = arith.constant 0 : i32
    return %arg0, %c0_i32, %c0_i32_0 : i32, i32, i32
  }
  func.func @transform_5(%arg0: i32) -> (i32, i32) {
    %c0_i32 = arith.constant 0 : i32
    %c0_i32_0 = arith.constant 0 : i32
    %c0_i32_1 = arith.constant 0 : i32
    return %c0_i32, %c0_i32_0 : i32, i32
  }
  func.func @transform_6(%arg0: i32) -> (i32, i32) {
    %c0_i32 = arith.constant 0 : i32
    %c0_i32_0 = arith.constant 0 : i32
    %c0_i32_1 = arith.constant 0 : i32
    return %c0_i32, %c0_i32_0 : i32, i32
  }
}

</mosaic_0001>

<llo_original>
// kernel: flow_forward.1
$region0: #{flow_forward.1}
  #allocation0 [shape = 'u32[]', space=smem, size = 0x4, offset = 0x4, fixed_abs, tag = 'smem constant byte address 0x4 - core index']
  #allocation1 [shape = 'u32[144,128]{1,0:T(1,128)}', space=vmem, size = 0x12000, scoped, tag = 'internal scratch']
  %s0 = inlined_call_operand.hbm [shape: f32[8,32], index: 0, kind: input, shape index: {}]
  %s1 = inlined_call_operand.hbm [shape: f32[4,16,32], index: 1, kind: input, shape index: {}]
  %s2 = inlined_call_operand.vmem [shape: f32[4,1,32], index: 2, kind: input, shape index: {}]
  %s3 = inlined_call_operand.hbm [shape: f32[4,32,32], index: 3, kind: input, shape index: {}]
  %s4 = inlined_call_operand.vmem [shape: f32[4,1,32], index: 4, kind: input, shape index: {}]
  %s5 = inlined_call_operand.hbm [shape: f32[8,32], index: 5, kind: output, shape index: {0}]
  %s6 = inlined_call_operand.vmem [shape: f32[8,1], index: 6, kind: output, shape index: {1}]
  %7 = xla_tuple %s5, %s6
  %s8 = sld [smem:[#allocation0]]
  $region85: #{flow_forward.1} parent=0
    _
  %s10 = ssub.s32 1, %s8
  %s11 = scalar_select 0, %s10, %s8
  $region1: #{flow_forward.1} parent=0
    #allocation2 [shape = 'u8[4096]{0}', space=vmem, size = 0x1000, scoped, tag = 'input window, operand 0, single buffered']
    #allocation3 [shape = 's32[2]{0}', space=sflag, size = 0x8, scoped, tag = 'scoped memory for flow_forward.1']
    #allocation4 [shape = 's32[2]{0}', space=sflag, size = 0x8, scoped, tag = 'scoped memory for flow_forward.1']
    #allocation5 [shape = 'u8[16384]{0}', space=vmem, size = 0x4000, scoped, tag = 'input window, operand 1']
    #allocation6 [shape = 's32[2]{0}', space=sflag, size = 0x8, scoped, tag = 'scoped memory for flow_forward.1']
    #allocation7 [shape = 'u8[32768]{0}', space=vmem, size = 0x8000, scoped, tag = 'input window, operand 3']
    #allocation8 [shape = 'u8[4096]{0}', space=vmem, size = 0x1000, scoped, tag = 'output window, operand 0, single buffered']
    %12 = vsyncpa [#allocation3], 0
    %13 = vsyncpa [#allocation6], 0
    %s14 = scalar_lea.sflag [#allocation6], 1
    %15 = vsyncpa %s14, 0
    %16 = vsyncpa [#allocation4], 0
    loop: start=0, step=1, limit=6
    $region2: #{flow_forward.1} parent=1 // loop_pre_header
      _
    $region3: #{flow_forward.1} parent=1 // loop_header
      %s18 = sphi 0, %s22
      %p19 = scmp.ge.s32.totalorder %s18, 6
      %s26 = sphi 0, %s26
      %s28 = sphi 0, %s26
      %s29 = sphi 0, %s28
      %s43 = sphi 0, %s29
      %s49 = sphi 0, %s51
      %s52 = sphi 0, %s49
      %s53 = sphi 0, %s52
      %s69 = sphi 0, %s53
      %s75 = sphi 0, %s77
      %s78 = sphi 0, %s75
      %s79 = sphi 0, %s78
      %s95 = sphi 0, %s79
      %s101 = sphi 0, %s103
      %s104 = sphi 0, %s101
      %s105 = sphi 0, %s104
      %s121 = sphi 0, %s105
      %s127 = sphi 0, %s129
      %s130 = sphi 0, %s127
      %s131 = sphi 0, %s130
      %s147 = sphi 0, %s131
      %s151 = sphi 0, %s151
      %s153 = sphi 0, %s151
      %s154 = sphi 0, %s153
      %s168 = sphi 0, %s154
      %s172 = sphi 0, %s172
      %s174 = sphi 0, %s172
      %s175 = sphi 0, %s174
      %s189 = sphi 0, %s175
    $region4: #{flow_forward.1} parent=1 // loop_header_branch
      %21 = sbr.rel (%p19) target = $region8
    $region5: #{flow_forward.1} parent=1 // loop_body
      %s23 = ssub.s32 %s18, 1
      %s24 = ssub.s32 %s18, 2
      %s25 = sadd.s32 %s18, 1
      %s27 = sadd.s32 %s26, 1
      %p30 = scmp.eq.s32.totalorder %s18, 3
      %p31 = scmp.ne.s32.totalorder %s26, %s28
      %p32 = scmp.eq.s32.totalorder %s18, 0
      %p33 = por %p31, %p32
      %p34 = scmp.ne.s32.totalorder %s26, %s28
      %p35 = scmp.eq.s32.totalorder %s23, 3
      %p36 = por %p34, %p35
      %p37 = scmp.ne.s32.totalorder %s28, %s29
      %p38 = scmp.eq.s32.totalorder %s23, 0
      %p39 = por %p37, %p38
      %p40 = scmp.ne.s32.totalorder %s28, %s29
      %p41 = scmp.eq.s32.totalorder %s24, 3
      %p42 = por %p40, %p41
      %p44 = scmp.ne.s32.totalorder %s29, %s43
      %p45 = scmp.eq.s32.totalorder %s24, 0
      %p46 = por %p44, %p45
      %s47 = ssub.s32 %s18, %s25
      %p48 = scmp.eq.s32.totalorder %s47, 0
      %s50 = sadd.s32 %s49, 1
      %s51 = scalar_select %p48, %s49, %s50
      %p54 = pneg %p48
      %p55 = scmp.eq.s32.totalorder %s18, 3
      %p56 = por %p54, %p55
      %p57 = scmp.ne.s32.totalorder %s49, %s52
      %p58 = scmp.eq.s32.totalorder %s18, 0
      %p59 = por %p57, %p58
      %p60 = scmp.ne.s32.totalorder %s49, %s52
      %p61 = scmp.eq.s32.totalorder %s23, 3
      %p62 = por %p60, %p61
      %p63 = scmp.ne.s32.totalorder %s52, %s53
      %p64 = scmp.eq.s32.totalorder %s23, 0
      %p65 = por %p63, %p64
      %p66 = scmp.ne.s32.totalorder %s52, %s53
      %p67 = scmp.eq.s32.totalorder %s24, 3
      %p68 = por %p66, %p67
      %p70 = scmp.ne.s32.totalorder %s53, %s69
      %p71 = scmp.eq.s32.totalorder %s24, 0
      %p72 = por %p70, %p71
      %s73 = ssub.s32 %s18, %s25
      %p74 = scmp.eq.s32.totalorder %s73, 0
      %s76 = sadd.s32 %s75, 1
      %s77 = scalar_select %p74, %s75, %s76
      %p80 = pneg %p74
      %p81 = scmp.eq.s32.totalorder %s18, 3
      %p82 = por %p80, %p81
      %p83 = scmp.ne.s32.totalorder %s75, %s78
      %p84 = scmp.eq.s32.totalorder %s18, 0
      %p85 = por %p83, %p84
      %p86 = scmp.ne.s32.totalorder %s75, %s78
      %p87 = scmp.eq.s32.totalorder %s23, 3
      %p88 = por %p86, %p87
      %p89 = scmp.ne.s32.totalorder %s78, %s79
      %p90 = scmp.eq.s32.totalorder %s23, 0
      %p91 = por %p89, %p90
      %p92 = scmp.ne.s32.totalorder %s78, %s79
      %p93 = scmp.eq.s32.totalorder %s24, 3
      %p94 = por %p92, %p93
      %p96 = scmp.ne.s32.totalorder %s79, %s95
      %p97 = scmp.eq.s32.totalorder %s24, 0
      %p98 = por %p96, %p97
      %s99 = ssub.s32 %s18, %s25
      %p100 = scmp.eq.s32.totalorder %s99, 0
      %s102 = sadd.s32 %s101, 1
      %s103 = scalar_select %p100, %s101, %s102
      %p106 = pneg %p100
      %p107 = scmp.eq.s32.totalorder %s18, 3
      %p108 = por %p106, %p107
      %p109 = scmp.ne.s32.totalorder %s101, %s104
      %p110 = scmp.eq.s32.totalorder %s18, 0
      %p111 = por %p109, %p110
      %p112 = scmp.ne.s32.totalorder %s101, %s104
      %p113 = scmp.eq.s32.totalorder %s23, 3
      %p114 = por %p112, %p113
      %p115 = scmp.ne.s32.totalorder %s104, %s105
      %p116 = scmp.eq.s32.totalorder %s23, 0
      %p117 = por %p115, %p116
      %p118 = scmp.ne.s32.totalorder %s104, %s105
      %p119 = scmp.eq.s32.totalorder %s24, 3
      %p120 = por %p118, %p119
      %p122 = scmp.ne.s32.totalorder %s105, %s121
      %p123 = scmp.eq.s32.totalorder %s24, 0
      %p124 = por %p122, %p123
      %s125 = ssub.s32 %s18, %s25
      %p126 = scmp.eq.s32.totalorder %s125, 0
      %s128 = sadd.s32 %s127, 1
      %s129 = scalar_select %p126, %s127, %s128
      %p132 = pneg %p126
      %p133 = scmp.eq.s32.totalorder %s18, 3
      %p134 = por %p132, %p133
      %p135 = scmp.ne.s32.totalorder %s127, %s130
      %p136 = scmp.eq.s32.totalorder %s18, 0
      %p137 = por %p135, %p136
      %p138 = scmp.ne.s32.totalorder %s127, %s130
      %p139 = scmp.eq.s32.totalorder %s23, 3
      %p140 = por %p138, %p139
      %p141 = scmp.ne.s32.totalorder %s130, %s131
      %p142 = scmp.eq.s32.totalorder %s23, 0
      %p143 = por %p141, %p142
      %p144 = scmp.ne.s32.totalorder %s130, %s131
      %p145 = scmp.eq.s32.totalorder %s24, 3
      %p146 = por %p144, %p145
      %p148 = scmp.ne.s32.totalorder %s131, %s147
      %p149 = scmp.eq.s32.totalorder %s24, 0
      %p150 = por %p148, %p149
      %s152 = sadd.s32 %s151, 1
      %p155 = scmp.eq.s32.totalorder %s18, 3
      %p156 = scmp.ne.s32.totalorder %s151, %s153
      %p157 = scmp.eq.s32.totalorder %s18, 0
      %p158 = por %p156, %p157
      %p159 = scmp.ne.s32.totalorder %s151, %s153
      %p160 = scmp.eq.s32.totalorder %s23, 3
      %p161 = por %p159, %p160
      %p162 = scmp.ne.s32.totalorder %s153, %s154
      %p163 = scmp.eq.s32.totalorder %s23, 0
      %p164 = por %p162, %p163
      %p165 = scmp.ne.s32.totalorder %s153, %s154
      %p166 = scmp.eq.s32.totalorder %s24, 3
      %p167 = por %p165, %p166
      %p169 = scmp.ne.s32.totalorder %s154, %s168
      %p170 = scmp.eq.s32.totalorder %s24, 0
      %p171 = por %p169, %p170
      %s173 = sadd.s32 %s172, 1
      %p176 = scmp.eq.s32.totalorder %s18, 3
      %p177 = scmp.ne.s32.totalorder %s172, %s174
      %p178 = scmp.eq.s32.totalorder %s18, 0
      %p179 = por %p177, %p178
      %p180 = scmp.ne.s32.totalorder %s172, %s174
      %p181 = scmp.eq.s32.totalorder %s23, 3
      %p182 = por %p180, %p181
      %p183 = scmp.ne.s32.totalorder %s174, %s175
      %p184 = scmp.eq.s32.totalorder %s23, 0
      %p185 = por %p183, %p184
      %p186 = scmp.ne.s32.totalorder %s174, %s175
      %p187 = scmp.eq.s32.totalorder %s24, 3
      %p188 = por %p186, %p187
      %p190 = scmp.ne.s32.totalorder %s175, %s189
      %p191 = scmp.eq.s32.totalorder %s24, 0
      %p192 = por %p190, %p191
      %p193 = scmp.le.s32.totalorder 1, %s18
      %p194 = scmp.lt.s32.totalorder %s18, 5
      %p195 = pnand %p193, %p194
      %p196 = pneg %p195
      // Predicated region
      $region9: #{flow_forward.1} parent=5 // pred_check
        _
      $region10: #{flow_forward.1} parent=5 // pred_check_branch
        %198 = sbr.rel (%p195) target = $region12
      $region11: #{flow_forward.1} parent=5 // pred_region
        %s199 = ssub.s32 %s18, 1
        // Predicated region
        $region13: #{flow_forward.1} parent=11 // pred_check
          %p200 = pneg %p39
        $region14: #{flow_forward.1} parent=11 // pred_check_branch
          %202 = sbr.rel (%p200) target = $region16
        $region15: #{flow_forward.1} parent=11 // pred_region
          %s204 = ssub.s32 128, 128
          %205 = vsyncadd [#allocation3], %s204
          %s207 = sshll.u32 [#allocation2], 4
          %s208 = int_to_ptr.vmem [resolvable:$true] %s207
          %210 = dma.hbm_to_vmem [thread:$0]  %s0, 128, %s208, [#allocation3]
        $region16: #{flow_forward.1} parent=11 // pred_fallthru
          _
      $region12: #{flow_forward.1} parent=5 // pred_fallthru
        _
      %p211 = scmp.lt.s32.totalorder %s18, 4
      // Predicated region
      $region17: #{flow_forward.1} parent=5 // pred_check
        %p212 = pneg %p211
      $region18: #{flow_forward.1} parent=5 // pred_check_branch
        %214 = sbr.rel (%p212) target = $region20
      $region19: #{flow_forward.1} parent=5 // pred_region
        // Predicated region
        $region21: #{flow_forward.1} parent=19 // pred_check
          %p215 = pneg %p59
        $region22: #{flow_forward.1} parent=19 // pred_check_branch
          %217 = sbr.rel (%p215) target = $region24
        $region23: #{flow_forward.1} parent=19 // pred_region
          %s218 = sand.u32 %s18, 1
          %s219 = scalar_lea.sflag [#allocation6], %s218
          %s220 = sand.u32 %s49, 1
          %s221 = smul.addr %s220, 16
          %s222 = scalar_lea.vmem [#allocation5], %s221
          %s224 = ssub.s32 256, 256
          %225 = vsyncadd %s219, %s224
          %s226 = smul.addr %s18, 2
          %s227 = smul.addr %s226, 128
          %s228 = scalar_lea.hbm %s1, %s227
          %s229 = sshll.u32 %s222, 4
          %s230 = int_to_ptr.vmem [resolvable:$true] %s229
          %235 = dma.hbm_to_vmem [thread:$0]  %s228, 256, %s230, %s219, 128, 128, 8
        $region24: #{flow_forward.1} parent=19 // pred_fallthru
          _
        // Predicated region
        $region25: #{flow_forward.1} parent=19 // pred_check
          %p236 = pneg %p85
        $region26: #{flow_forward.1} parent=19 // pred_check_branch
          %238 = sbr.rel (%p236) target = $region28
        $region27: #{flow_forward.1} parent=19 // pred_region
          %p239 = scmp.lt.s32.totalorder %s18, 3
          %s240 = scalar_select %p239, %s18, 3
          %s241 = scalar_lea.vmem %s2, %s240
        $region28: #{flow_forward.1} parent=19 // pred_fallthru
          _
        // Predicated region
        $region29: #{flow_forward.1} parent=19 // pred_check
          %p242 = pneg %p111
        $region30: #{flow_forward.1} parent=19 // pred_check_branch
          %244 = sbr.rel (%p242) target = $region32
        $region31: #{flow_forward.1} parent=19 // pred_region
          %s245 = sand.u32 %s18, 1
          %s246 = scalar_lea.sflag [#allocation6], %s245
          %s247 = sand.u32 %s101, 1
          %s248 = smul.addr %s247, 32
          %s249 = scalar_lea.vmem [#allocation7], %s248
          %s251 = ssub.s32 512, 512
          %252 = vsyncadd %s246, %s251
          %s253 = smul.addr %s18, 4
          %s254 = smul.addr %s253, 128
          %s255 = scalar_lea.hbm %s3, %s254
          %s256 = sshll.u32 %s249, 4
          %s257 = int_to_ptr.vmem [resolvable:$true] %s256
          %262 = dma.hbm_to_vmem [thread:$0]  %s255, 512, %s257, %s246, 128, 128, 8
        $region32: #{flow_forward.1} parent=19 // pred_fallthru
          _
        // Predicated region
        $region33: #{flow_forward.1} parent=19 // pred_check
          %p263 = pneg %p137
        $region34: #{flow_forward.1} parent=19 // pred_check_branch
          %265 = sbr.rel (%p263) target = $region36
        $region35: #{flow_forward.1} parent=19 // pred_region
          %p266 = scmp.lt.s32.totalorder %s18, 3
          %s267 = scalar_select %p266, %s18, 3
          %s268 = scalar_lea.vmem %s4, %s267
        $region36: #{flow_forward.1} parent=19 // pred_fallthru
          _
      $region20: #{flow_forward.1} parent=5 // pred_fallthru
        _
      %p269 = scmp.le.s32.totalorder 1, %s18
      %p270 = scmp.lt.s32.totalorder %s18, 5
      %p271 = pnand %p269, %p270
      %p272 = pneg %p271
      // Predicated region
      $region37: #{flow_forward.1} parent=5 // pred_check
        _
      $region38: #{flow_forward.1} parent=5 // pred_check_branch
        %274 = sbr.rel (%p271) target = $region40
      $region39: #{flow_forward.1} parent=5 // pred_region
        %s275 = ssub.s32 %s18, 1
        // Predicated region
        $region41: #{flow_forward.1} parent=39 // pred_check
          %p276 = pneg %p39
        $region42: #{flow_forward.1} parent=39 // pred_check_branch
          %278 = sbr.rel (%p276) target = $region44
        $region43: #{flow_forward.1} parent=39 // pred_region
          %279 = dma.done [#allocation3], 128
        $region44: #{flow_forward.1} parent=39 // pred_fallthru
          _
        %s280 = sand.u32 %s23, 1
        %s281 = scalar_lea.sflag [#allocation6], %s280
        %s282 = sand.u32 %s52, 1
        %s283 = smul.addr %s282, 16
        %s284 = scalar_lea.vmem [#allocation5], %s283
        // Predicated region
        $region45: #{flow_forward.1} parent=39 // pred_check
          %p285 = pneg %p65
        $region46: #{flow_forward.1} parent=39 // pred_check_branch
          %287 = sbr.rel (%p285) target = $region48
        $region47: #{flow_forward.1} parent=39 // pred_region
          %288 = dma.done %s281, 256
        $region48: #{flow_forward.1} parent=39 // pred_fallthru
          _
        %s289 = sand.u32 %s23, 1
        %s290 = scalar_lea.sflag [#allocation6], %s289
        %s291 = sand.u32 %s104, 1
        %s292 = smul.addr %s291, 32
        %s293 = scalar_lea.vmem [#allocation7], %s292
        // Predicated region
        $region49: #{flow_forward.1} parent=39 // pred_check
          %p294 = pneg %p117
        $region50: #{flow_forward.1} parent=39 // pred_check_branch
          %296 = sbr.rel (%p294) target = $region52
        $region51: #{flow_forward.1} parent=39 // pred_region
          %297 = dma.done %s290, 512
        $region52: #{flow_forward.1} parent=39 // pred_fallthru
          _
        %p298 = pneg %p39
        %p299 = pneg %p36
        %s300 = sand.u32 %s23, 1
        %s301 = scalar_lea.sflag [#allocation6], %s300
        %s302 = sand.u32 %s52, 1
        %s303 = smul.addr %s302, 16
        %s304 = scalar_lea.vmem [#allocation5], %s303
        %p305 = pneg %p65
        %p306 = pneg %p62
        %p307 = scmp.lt.s32.totalorder %s23, 3
        %s308 = scalar_select %p307, %s23, 3
        %s309 = scalar_lea.vmem %s2, %s308
        %p310 = pneg %p91
        %p311 = pneg %p88
        %s312 = sand.u32 %s23, 1
        %s313 = scalar_lea.sflag [#allocation6], %s312
        %s314 = sand.u32 %s104, 1
        %s315 = smul.addr %s314, 32
        %s316 = scalar_lea.vmem [#allocation7], %s315
        %p317 = pneg %p117
        %p318 = pneg %p114
        %p319 = scmp.lt.s32.totalorder %s23, 3
        %s320 = scalar_select %p319, %s23, 3
        %s321 = scalar_lea.vmem %s4, %s320
        %p322 = pneg %p143
        %p323 = pneg %p140
        %p324 = pneg %p164
        %p325 = pneg %p161
        %p326 = pneg %p185
        %p327 = pneg %p182
        %p328 = scmp.lt.s32.totalorder %s23, 3
        %s329 = scalar_select %p328, %s23, 3
        %s330 = scalar_lea.vmem %s2, %s329
        %p331 = scmp.lt.s32.totalorder %s23, 3
        %s332 = scalar_select %p331, %s23, 3
        %s333 = scalar_lea.vmem %s4, %s332
        %p334 = scmp.eq.s32.totalorder %s23, 0
        // Predicated region
        $region53: #{flow_forward.1} parent=39 // pred_check
          %p335 = pneg %p334
        $region54: #{flow_forward.1} parent=39 // pred_check_branch
          %337 = sbr.rel (%p335) target = $region56
        $region55: #{flow_forward.1} parent=39 // pred_region
          %v338 = vld [vmem:[#allocation2] sm:$0xff]
          %vm339 = vcmask 261120
          %340 = vst.msk [vmem:[#allocation8] sm:$0xff] %vm339, %v338
          %vm341 = vcmask 7168
          %342 = vst.msk [vmem:[%s6] sm:$0xff] %vm341, 0.0
        $region56: #{flow_forward.1} parent=39 // pred_fallthru
          _
        %p343 = scmp.lt.s32.totalorder %s23, 0
        %s344 = ssub.s32 0, %s23
        %s345 = scalar_select %p343, %s344, %s23
        %s346 = sand.u32 %s345, 1
        %s347 = ssub.s32 0, %s346
        %s348 = scalar_select %p343, %s347, %s346
        %p349 = scmp.ne.s32.totalorder %s348, 0
        %p350 = scmp.lt.s32.totalorder %s348, 0
        %p351 = pnand %p350, %p349
        %p352 = pneg %p351
        %s353 = sadd.s32 %s348, 2
        %s354 = scalar_select %p352, %s353, %s348
        %p355 = scmp.eq.s32.totalorder %s354, 0
        // Predicated region
        $region57: #{flow_forward.1} parent=39 // pred_check
          %p356 = pneg %p355
        $region58: #{flow_forward.1} parent=39 // pred_check_branch
          %358 = sbr.rel (%p356) target = $region60
        $region59: #{flow_forward.1} parent=39 // pred_region
          %v359 = vld [vmem:[#allocation8] sm:$0xff]
          %v360 = vld [vmem:[%s284] sm:$0xff]
          %v361 = vld [vmem:[%s284 + $0x8] sm:$0xff]
          %v362 = vld [vmem:[%s330] sm:$0x1]
          %v364 = vlaneseq
          %v365 = vshrl.u32 %v364, 7
          %v366 = vsub.s32 0, %v365
          %v367 = vrot.slane %v362, %v366
          %vm369 = vcmask 130048
          %v371 = vsel %vm369, %v359, 0
          %373 = vmatprep.subr.mxu0 0.0
          %374 = vmatpush1.msra.mxu0 %v360
          %375 = vmatprep.subr.mxu0 0.0
          %376 = vmatpush1.msra.mxu0 %v361
          %377 = vmatprep.subr.mxu0 0.0
          %378 = vmatpush1.msra.mxu0 0.0
          %379 = vmatprep.subr.mxu0 0.0
          %380 = vmatpush1.msra.mxu0 0.0
          %381 = vmatprep.subr.mxu0 0.0
          %382 = vmatpush1.msra.mxu0 0.0
          %383 = vmatprep.subr.mxu0 0.0
          %384 = vmatpush1.msra.mxu0 0.0
          %385 = vmatprep.subr.mxu0 0.0
          %386 = vmatpush1.msra.mxu0 0.0
          %387 = vmatprep.subr.mxu0 0.0
          %388 = vmatpush1.msra.mxu0 0.0
          %389 = vmatprep.subr.mxu0 0.0
          %390 = vmatpush1.msra.mxu0 0.0
          %391 = vmatprep.subr.mxu0 0.0
          %392 = vmatpush1.msra.mxu0 0.0
          %393 = vmatprep.subr.mxu0 0.0
          %394 = vmatpush1.msra.mxu0 0.0
          %395 = vmatprep.subr.mxu0 0.0
          %396 = vmatpush1.msra.mxu0 0.0
          %397 = vmatprep.subr.mxu0 0.0
          %398 = vmatpush1.msra.mxu0 0.0
          %399 = vmatprep.subr.mxu0 0.0
          %400 = vmatpush1.msra.mxu0 0.0
          %401 = vmatprep.subr.mxu0 0.0
          %402 = vmatpush1.msra.mxu0 0.0
          %403 = vmatprep.subr.mxu0 0.0
          %404 = vmatpush1.msra.mxu0 0.0
          %405 = vmatprep.subr.mxu0 0.0
          %406 = vmatpush1.msra.mxu0 0.0
          %407 = vmatprep.subr.mxu0 0.0
          %408 = vmatpush1.msra.mxu0 0.0
          %409 = vmatprep.subr.mxu0 0.0
          %410 = vmatpush1.msra.mxu0 0.0
          %411 = vmatprep.subr.mxu0 0.0
          %412 = vmatpush1.msra.mxu0 0.0
          %413 = vmatprep.subr.mxu0 0.0
          %414 = vmatpush1.msra.mxu0 0.0
          %415 = vmatprep.subr.mxu0 0.0
          %416 = vmatpush1.msra.mxu0 0.0
          %417 = vmatprep.subr.mxu0 0.0
          %418 = vmatpush1.msra.mxu0 0.0
          %419 = vmatprep.subr.mxu0 0.0
          %420 = vmatpush1.msra.mxu0 0.0
          %421 = vmatprep.subr.mxu0 0.0
          %422 = vmatpush1.msra.mxu0 0.0
          %423 = vmatprep.subr.mxu0 0.0
          %424 = vmatpush1.msra.mxu0 0.0
          %425 = vmatprep.subr.mxu0 0.0
          %426 = vmatpush1.msra.mxu0 0.0
          %427 = vmatprep.subr.mxu0 0.0
          %428 = vmatpush1.msra.mxu0 0.0
          %429 = vmatprep.subr.mxu0 0.0
          %430 = vmatpush1.msra.mxu0 0.0
          %431 = vmatprep.subr.mxu0 0.0
          %432 = vmatpush1.msra.mxu0 0.0
          %433 = vmatprep.subr.mxu0 0.0
          %434 = vmatpush1.msra.mxu0 0.0
          %435 = vmatprep.subr.mxu0 0.0
          %436 = vmatpush1.msra.mxu0 0.0
          %437 = vmatprep.mubr.f32.mxu0 0.0
          %438 = vmatmul.mubr.f32.gmra.mrb[0].mxu0 %v371
          %v439 = vpop.f32.mrb[0].mxu0
          %v440 = vadd.f32 %v367, %v439
          %v441 = vpop.f32.mrb[0].mxu0
          %442 = vdwg.mxu0
          %v443 = vmax.f32 %v440, 0.0
          %v444 = vld [vmem:[%s293] sm:$0xff]
          %v445 = vld [vmem:[%s293 + $0x8] sm:$0xff]
          %v446 = vld [vmem:[%s293 + $0x10] sm:$0xff]
          %v447 = vld [vmem:[%s293 + $0x18] sm:$0xff]
          %v448 = vld [vmem:[%s333] sm:$0x1]
          %v450 = vlaneseq
          %v451 = vshrl.u32 %v450, 7
          %v452 = vsub.s32 0, %v451
          %v453 = vrot.slane %v448, %v452
          %vm455 = vcmask 261120
          %v457 = vsel %vm455, %v443, 0
          %459 = vmatprep.subr.mxu0 0.0
          %460 = vmatpush1.msra.mxu0 %v444
          %461 = vmatprep.subr.mxu0 0.0
          %462 = vmatpush1.msra.mxu0 %v445
          %463 = vmatprep.subr.mxu0 0.0
          %464 = vmatpush1.msra.mxu0 %v446
          %465 = vmatprep.subr.mxu0 0.0
          %466 = vmatpush1.msra.mxu0 %v447
          %467 = vmatprep.subr.mxu0 0.0
          %468 = vmatpush1.msra.mxu0 0.0
          %469 = vmatprep.subr.mxu0 0.0
          %470 = vmatpush1.msra.mxu0 0.0
          %471 = vmatprep.subr.mxu0 0.0
          %472 = vmatpush1.msra.mxu0 0.0
          %473 = vmatprep.subr.mxu0 0.0
          %474 = vmatpush1.msra.mxu0 0.0
          %475 = vmatprep.subr.mxu0 0.0
          %476 = vmatpush1.msra.mxu0 0.0
          %477 = vmatprep.subr.mxu0 0.0
          %478 = vmatpush1.msra.mxu0 0.0
          %479 = vmatprep.subr.mxu0 0.0
          %480 = vmatpush1.msra.mxu0 0.0
          %481 = vmatprep.subr.mxu0 0.0
          %482 = vmatpush1.msra.mxu0 0.0
          %483 = vmatprep.subr.mxu0 0.0
          %484 = vmatpush1.msra.mxu0 0.0
          %485 = vmatprep.subr.mxu0 0.0
          %486 = vmatpush1.msra.mxu0 0.0
          %487 = vmatprep.subr.mxu0 0.0
          %488 = vmatpush1.msra.mxu0 0.0
          %489 = vmatprep.subr.mxu0 0.0
          %490 = vmatpush1.msra.mxu0 0.0
          %491 = vmatprep.subr.mxu0 0.0
          %492 = vmatpush1.msra.mxu0 0.0
          %493 = vmatprep.subr.mxu0 0.0
          %494 = vmatpush1.msra.mxu0 0.0
          %495 = vmatprep.subr.mxu0 0.0
          %496 = vmatpush1.msra.mxu0 0.0
          %497 = vmatprep.subr.mxu0 0.0
          %498 = vmatpush1.msra.mxu0 0.0
          %499 = vmatprep.subr.mxu0 0.0
          %500 = vmatpush1.msra.mxu0 0.0
          %501 = vmatprep.subr.mxu0 0.0
          %502 = vmatpush1.msra.mxu0 0.0
          %503 = vmatprep.subr.mxu0 0.0
          %504 = vmatpush1.msra.mxu0 0.0
          %505 = vmatprep.subr.mxu0 0.0
          %506 = vmatpush1.msra.mxu0 0.0
          %507 = vmatprep.subr.mxu0 0.0
          %508 = vmatpush1.msra.mxu0 0.0
          %509 = vmatprep.subr.mxu0 0.0
          %510 = vmatpush1.msra.mxu0 0.0
          %511 = vmatprep.subr.mxu0 0.0
          %512 = vmatpush1.msra.mxu0 0.0
          %513 = vmatprep.subr.mxu0 0.0
          %514 = vmatpush1.msra.mxu0 0.0
          %515 = vmatprep.subr.mxu0 0.0
          %516 = vmatpush1.msra.mxu0 0.0
          %517 = vmatprep.subr.mxu0 0.0
          %518 = vmatpush1.msra.mxu0 0.0
          %519 = vmatprep.subr.mxu0 0.0
          %520 = vmatpush1.msra.mxu0 0.0
          %521 = vmatprep.subr.mxu0 0.0
          %522 = vmatpush1.msra.mxu0 0.0
          %523 = vmatprep.mubr.f32.mxu0 0.0
          %524 = vmatmul.mubr.f32.gmra.mrb[0].mxu0 %v457
          %v525 = vpop.f32.mrb[0].mxu0
          %v526 = vadd.f32 %v453, %v525
          %v527 = vpop.f32.mrb[0].mxu0
          %528 = vdwg.mxu0
          %v529 = vtanh.pop %v526
          %v530 = vld [vmem:[%s6] sm:$0xff]
          %v531 = vsel %vm369, %v529, 0.0
          %532 = vadd.xlane.f32.xlu0 %v531
          %v533 = vpop.xlane.xlu0 %532
          %v534 = vadd.f32 %v530, %v533
          %vm535 = vcmask 7168
          %536 = vst.msk [vmem:[%s6] sm:$0xff] %vm535, %v534
          %v537 = vmul.f32 %v529, 1.442695
          %v538 = vpow.pop %v537
          %540 = vrot.lane.b32.xlu0 %v538, 16
          %v541 = vpop.permute.xlu0 %540
          %v543 = vmul.f32 %v359, %v541
          %v544 = vadd.f32 %v543, %v526
          %vm545 = vcmask 261248
          %546 = vst.msk [vmem:[#allocation8] sm:$0xff] %vm545, %v544
        $region60: #{flow_forward.1} parent=39 // pred_fallthru
          _
        %p547 = scmp.eq.s32.totalorder %s354, 1
        // Predicated region
        $region61: #{flow_forward.1} parent=39 // pred_check
          %p548 = pneg %p547
        $region62: #{flow_forward.1} parent=39 // pred_check_branch
          %550 = sbr.rel (%p548) target = $region64
        $region63: #{flow_forward.1} parent=39 // pred_region
          %v551 = vld [vmem:[#allocation8] sm:$0xff]
          %v552 = vld [vmem:[%s284] sm:$0xff]
          %v553 = vld [vmem:[%s284 + $0x8] sm:$0xff]
          %v554 = vld [vmem:[%s330] sm:$0x1]
          %v556 = vlaneseq
          %v557 = vshrl.u32 %v556, 7
          %v558 = vsub.s32 0, %v557
          %v559 = vrot.slane %v554, %v558
          %562 = vrot.lane.b32.xlu0 %v551, 112
          %v563 = vpop.permute.xlu0 %562
          %vm564 = vcmask 130048
          %v565 = vsel %vm564, %v563, 0
          %567 = vmatprep.subr.mxu0 0.0
          %568 = vmatpush1.msra.mxu0 %v552
          %569 = vmatprep.subr.mxu0 0.0
          %570 = vmatpush1.msra.mxu0 %v553
          %571 = vmatprep.subr.mxu0 0.0
          %572 = vmatpush1.msra.mxu0 0.0
          %573 = vmatprep.subr.mxu0 0.0
          %574 = vmatpush1.msra.mxu0 0.0
          %575 = vmatprep.subr.mxu0 0.0
          %576 = vmatpush1.msra.mxu0 0.0
          %577 = vmatprep.subr.mxu0 0.0
          %578 = vmatpush1.msra.mxu0 0.0
          %579 = vmatprep.subr.mxu0 0.0
          %580 = vmatpush1.msra.mxu0 0.0
          %581 = vmatprep.subr.mxu0 0.0
          %582 = vmatpush1.msra.mxu0 0.0
          %583 = vmatprep.subr.mxu0 0.0
          %584 = vmatpush1.msra.mxu0 0.0
          %585 = vmatprep.subr.mxu0 0.0
          %586 = vmatpush1.msra.mxu0 0.0
          %587 = vmatprep.subr.mxu0 0.0
          %588 = vmatpush1.msra.mxu0 0.0
          %589 = vmatprep.subr.mxu0 0.0
          %590 = vmatpush1.msra.mxu0 0.0
          %591 = vmatprep.subr.mxu0 0.0
          %592 = vmatpush1.msra.mxu0 0.0
          %593 = vmatprep.subr.mxu0 0.0
          %594 = vmatpush1.msra.mxu0 0.0
          %595 = vmatprep.subr.mxu0 0.0
          %596 = vmatpush1.msra.mxu0 0.0
          %597 = vmatprep.subr.mxu0 0.0
          %598 = vmatpush1.msra.mxu0 0.0
          %599 = vmatprep.subr.mxu0 0.0
          %600 = vmatpush1.msra.mxu0 0.0
          %601 = vmatprep.subr.mxu0 0.0
          %602 = vmatpush1.msra.mxu0 0.0
          %603 = vmatprep.subr.mxu0 0.0
          %604 = vmatpush1.msra.mxu0 0.0
          %605 = vmatprep.subr.mxu0 0.0
          %606 = vmatpush1.msra.mxu0 0.0
          %607 = vmatprep.subr.mxu0 0.0
          %608 = vmatpush1.msra.mxu0 0.0
          %609 = vmatprep.subr.mxu0 0.0
          %610 = vmatpush1.msra.mxu0 0.0
          %611 = vmatprep.subr.mxu0 0.0
          %612 = vmatpush1.msra.mxu0 0.0
          %613 = vmatprep.subr.mxu0 0.0
          %614 = vmatpush1.msra.mxu0 0.0
          %615 = vmatprep.subr.mxu0 0.0
          %616 = vmatpush1.msra.mxu0 0.0
          %617 = vmatprep.subr.mxu0 0.0
          %618 = vmatpush1.msra.mxu0 0.0
          %619 = vmatprep.subr.mxu0 0.0
          %620 = vmatpush1.msra.mxu0 0.0
          %621 = vmatprep.subr.mxu0 0.0
          %622 = vmatpush1.msra.mxu0 0.0
          %623 = vmatprep.subr.mxu0 0.0
          %624 = vmatpush1.msra.mxu0 0.0
          %625 = vmatprep.subr.mxu0 0.0
          %626 = vmatpush1.msra.mxu0 0.0
          %627 = vmatprep.subr.mxu0 0.0
          %628 = vmatpush1.msra.mxu0 0.0
          %629 = vmatprep.subr.mxu0 0.0
          %630 = vmatpush1.msra.mxu0 0.0
          %631 = vmatprep.mubr.f32.mxu0 0.0
          %632 = vmatmul.mubr.f32.gmra.mrb[0].mxu0 %v565
          %v633 = vpop.f32.mrb[0].mxu0
          %v634 = vadd.f32 %v559, %v633
          %v635 = vpop.f32.mrb[0].mxu0
          %636 = vdwg.mxu0
          %v637 = vmax.f32 %v634, 0.0
          %v638 = vld [vmem:[%s293] sm:$0xff]
          %v639 = vld [vmem:[%s293 + $0x8] sm:$0xff]
          %v640 = vld [vmem:[%s293 + $0x10] sm:$0xff]
          %v641 = vld [vmem:[%s293 + $0x18] sm:$0xff]
          %v642 = vld [vmem:[%s333] sm:$0x1]
          %v644 = vlaneseq
          %v645 = vshrl.u32 %v644, 7
          %v646 = vsub.s32 0, %v645
          %v647 = vrot.slane %v642, %v646
          %vm649 = vcmask 261120
          %v651 = vsel %vm649, %v637, 0
          %653 = vmatprep.subr.mxu0 0.0
          %654 = vmatpush1.msra.mxu0 %v638
          %655 = vmatprep.subr.mxu0 0.0
          %656 = vmatpush1.msra.mxu0 %v639
          %657 = vmatprep.subr.mxu0 0.0
          %658 = vmatpush1.msra.mxu0 %v640
          %659 = vmatprep.subr.mxu0 0.0
          %660 = vmatpush1.msra.mxu0 %v641
          %661 = vmatprep.subr.mxu0 0.0
          %662 = vmatpush1.msra.mxu0 0.0
          %663 = vmatprep.subr.mxu0 0.0
          %664 = vmatpush1.msra.mxu0 0.0
          %665 = vmatprep.subr.mxu0 0.0
          %666 = vmatpush1.msra.mxu0 0.0
          %667 = vmatprep.subr.mxu0 0.0
          %668 = vmatpush1.msra.mxu0 0.0
          %669 = vmatprep.subr.mxu0 0.0
          %670 = vmatpush1.msra.mxu0 0.0
          %671 = vmatprep.subr.mxu0 0.0
          %672 = vmatpush1.msra.mxu0 0.0
          %673 = vmatprep.subr.mxu0 0.0
          %674 = vmatpush1.msra.mxu0 0.0
          %675 = vmatprep.subr.mxu0 0.0
          %676 = vmatpush1.msra.mxu0 0.0
          %677 = vmatprep.subr.mxu0 0.0
          %678 = vmatpush1.msra.mxu0 0.0
          %679 = vmatprep.subr.mxu0 0.0
          %680 = vmatpush1.msra.mxu0 0.0
          %681 = vmatprep.subr.mxu0 0.0
          %682 = vmatpush1.msra.mxu0 0.0
          %683 = vmatprep.subr.mxu0 0.0
          %684 = vmatpush1.msra.mxu0 0.0
          %685 = vmatprep.subr.mxu0 0.0
          %686 = vmatpush1.msra.mxu0 0.0
          %687 = vmatprep.subr.mxu0 0.0
          %688 = vmatpush1.msra.mxu0 0.0
          %689 = vmatprep.subr.mxu0 0.0
          %690 = vmatpush1.msra.mxu0 0.0
          %691 = vmatprep.subr.mxu0 0.0
          %692 = vmatpush1.msra.mxu0 0.0
          %693 = vmatprep.subr.mxu0 0.0
          %694 = vmatpush1.msra.mxu0 0.0
          %695 = vmatprep.subr.mxu0 0.0
          %696 = vmatpush1.msra.mxu0 0.0
          %697 = vmatprep.subr.mxu0 0.0
          %698 = vmatpush1.msra.mxu0 0.0
          %699 = vmatprep.subr.mxu0 0.0
          %700 = vmatpush1.msra.mxu0 0.0
          %701 = vmatprep.subr.mxu0 0.0
          %702 = vmatpush1.msra.mxu0 0.0
          %703 = vmatprep.subr.mxu0 0.0
          %704 = vmatpush1.msra.mxu0 0.0
          %705 = vmatprep.subr.mxu0 0.0
          %706 = vmatpush1.msra.mxu0 0.0
          %707 = vmatprep.subr.mxu0 0.0
          %708 = vmatpush1.msra.mxu0 0.0
          %709 = vmatprep.subr.mxu0 0.0
          %710 = vmatpush1.msra.mxu0 0.0
          %711 = vmatprep.subr.mxu0 0.0
          %712 = vmatpush1.msra.mxu0 0.0
          %713 = vmatprep.subr.mxu0 0.0
          %714 = vmatpush1.msra.mxu0 0.0
          %715 = vmatprep.subr.mxu0 0.0
          %716 = vmatpush1.msra.mxu0 0.0
          %717 = vmatprep.mubr.f32.mxu0 0.0
          %718 = vmatmul.mubr.f32.gmra.mrb[0].mxu0 %v651
          %v719 = vpop.f32.mrb[0].mxu0
          %v720 = vadd.f32 %v647, %v719
          %v721 = vpop.f32.mrb[0].mxu0
          %722 = vdwg.mxu0
          %v723 = vtanh.pop %v720
          %v724 = vld [vmem:[%s6] sm:$0xff]
          %v725 = vsel %vm564, %v723, 0.0
          %726 = vadd.xlane.f32.xlu0 %v725
          %v727 = vpop.xlane.xlu0 %726
          %v728 = vadd.f32 %v724, %v727
          %vm729 = vcmask 7168
          %730 = vst.msk [vmem:[%s6] sm:$0xff] %vm729, %v728
          %v731 = vmul.f32 %v723, 1.442695
          %v732 = vpow.pop %v731
          %v733 = vmul.f32 %v551, %v732
          %735 = vrot.lane.b32.xlu0 %v720, 112
          %v736 = vpop.permute.xlu0 %735
          %v738 = vadd.f32 %v733, %v736
          %739 = vst.msk [vmem:[#allocation8] sm:$0xff] %vm564, %v738
        $region64: #{flow_forward.1} parent=39 // pred_fallthru
          _
        // Predicated region
        $region65: #{flow_forward.1} parent=39 // pred_check
          %p740 = pneg %p161
        $region66: #{flow_forward.1} parent=39 // pred_check_branch
          %742 = sbr.rel (%p740) target = $region68
        $region67: #{flow_forward.1} parent=39 // pred_region
          %s744 = ssub.s32 128, 128
          %745 = vsyncadd [#allocation4], %s744
          %s747 = sshll.u32 [#allocation8], 4
          %s748 = int_to_ptr.vmem [resolvable:$true] %s747
          %750 = dma.vmem_to_hbm [thread:$0]  %s748, 128, %s5, [#allocation4]
        $region68: #{flow_forward.1} parent=39 // pred_fallthru
          _
        // Predicated region
        $region69: #{flow_forward.1} parent=39 // pred_check
          %p751 = pneg %p182
        $region70: #{flow_forward.1} parent=39 // pred_check_branch
          %753 = sbr.rel (%p751) target = $region72
        $region71: #{flow_forward.1} parent=39 // pred_region
          _
        $region72: #{flow_forward.1} parent=39 // pred_fallthru
          _
        // Predicated region
        $region73: #{flow_forward.1} parent=39 // pred_check
          %p754 = pneg %p161
        $region74: #{flow_forward.1} parent=39 // pred_check_branch
          %756 = sbr.rel (%p754) target = $region76
        $region75: #{flow_forward.1} parent=39 // pred_region
          %757 = dma.done [#allocation4], 128
        $region76: #{flow_forward.1} parent=39 // pred_fallthru
          _
        // Predicated region
        $region77: #{flow_forward.1} parent=39 // pred_check
          %p758 = pneg %p182
        $region78: #{flow_forward.1} parent=39 // pred_check_branch
          %760 = sbr.rel (%p758) target = $region80
        $region79: #{flow_forward.1} parent=39 // pred_region
          _
        $region80: #{flow_forward.1} parent=39 // pred_fallthru
          _
      $region40: #{flow_forward.1} parent=5 // pred_fallthru
        _
      %p761 = scmp.le.s32.totalorder 2, %s18
      // Predicated region
      $region81: #{flow_forward.1} parent=5 // pred_check
        %p762 = pneg %p761
      $region82: #{flow_forward.1} parent=5 // pred_check_branch
        %764 = sbr.rel (%p762) target = $region84
      $region83: #{flow_forward.1} parent=5 // pred_region
        %s765 = ssub.s32 %s18, 2
      $region84: #{flow_forward.1} parent=5 // pred_fallthru
        _
    $region6: #{flow_forward.1} parent=1 // loop_footer
      %s22 = sadd.s32 1, %s18
    $region7: #{flow_forward.1} parent=1 // loop_footer_branch
      %17 = sbr.rel target = $region3
    $region8: #{flow_forward.1} parent=1 // loop_exit
      _
    %766 = vsyncpa [#allocation3], 1
    %s767 = scalar_lea.sflag [#allocation3], 1
    %768 = vsyncpa %s767, 1
    %769 = vsyncpa [#allocation6], 1
    %s770 = scalar_lea.sflag [#allocation6], 1
    %771 = vsyncpa %s770, 1
    %772 = vsyncpa [#allocation4], 1
    %s773 = scalar_lea.sflag [#allocation4], 1
    %774 = vsyncpa %s773, 1

</llo_original>
